<compile_context>
chip_gen: v5e
topology: v5e:2x2
jax: 0.10.0
libtpu: 0.0.40
codegen_flags: <defaults>
</compile_context>

<pallas_src>
import functools

import jax
import jax.numpy as jnp
from jax.experimental import pallas as pl
from jax.experimental.pallas import tpu as pltpu


# ---------------------------------------------------------------------------
# Kernel bodies
# ---------------------------------------------------------------------------
def _per_pixel_loss(pred_ref, tgt_ref, w_ref, *, use_weights, poly_one, coef):
    """Per-pixel cross-entropy on one (TB, C, T_HW) tile -> (TB, 1, T_HW) f32."""
    logits = pred_ref[...].astype(jnp.float32)              # (TB, C, T)
    tgt = tgt_ref[...].astype(jnp.int32)                     # (TB, 1, T)

    # numerically stable log-sum-exp over the class (sublane) axis
    m = jnp.max(logits, axis=1, keepdims=True)               # (TB, 1, T)
    # NOTE: exp kept in f32 (required on v5e; if profiling on v6e/v7x ever shows
    # the EUP slot binding, a bf16 exp here would halve its cost).
    lse = m + jnp.log(jnp.sum(jnp.exp(logits - m), axis=1, keepdims=True))

    # gather the target-class logit via a one-hot select (no dynamic gather on TPU)
    cls_iota = jax.lax.broadcasted_iota(jnp.int32, logits.shape, 1)   # (TB, C, T)
    onehot = cls_iota == tgt
    logit_t = jnp.sum(jnp.where(onehot, logits, 0.0), axis=1, keepdims=True)

    loss = lse - logit_t                                      # (TB, 1, T)

    if use_weights:
        # the second masked reduce only exists on the weighted path
        wvec = w_ref[...].astype(jnp.float32)[None]           # (1, C, 1)
        wt = jnp.sum(jnp.where(onehot, wvec, 0.0), axis=1, keepdims=True)
        loss = loss * wt

    if poly_one:
        loss = loss + jnp.float32(coef) * (1.0 - jnp.exp(-loss))

    return loss


def _make_sum_kernel(use_weights, poly_one, coef):
    """Kernel that accumulates per-sample loss sums (no top-k path)."""

    def kernel(pred_ref, tgt_ref, w_ref, sum_ref):
        # sum_ref: (TB, 1, 128) f32 accumulator, resident across the pixel-tile axis
        @pl.when(pl.program_id(1) == 0)
        def _():
            sum_ref[...] = jnp.zeros_like(sum_ref)

        loss = _per_pixel_loss(
            pred_ref, tgt_ref, w_ref,
            use_weights=use_weights, poly_one=poly_one, coef=coef)
        part = jnp.sum(loss, axis=2, keepdims=True)           # (TB, 1, 1)
        sum_ref[...] = sum_ref[...] + part                    # broadcast over lanes

    return kernel


def _make_map_kernel(use_weights, poly_one, coef):
    """Kernel that writes the full per-pixel loss map (needed for top-k)."""

    def kernel(pred_ref, tgt_ref, w_ref, out_ref):
        out_ref[...] = _per_pixel_loss(
            pred_ref, tgt_ref, w_ref,
            use_weights=use_weights, poly_one=poly_one, coef=coef)

    return kernel


# ---------------------------------------------------------------------------
# Tiling heuristic
# ---------------------------------------------------------------------------
def _choose_tiles(BS, c, HW, cap_bytes=1 << 20):
    """Pick (TB, T_HW): samples-per-step and pixels-per-step.

    Keeps the f32 working tile (TB * c * T_HW * 4 bytes) under `cap_bytes` so the
    elementwise temporaries plus double-buffered inputs comfortably fit scoped
    VMEM on every generation (16 MiB default on v5e, 64 MiB physical on v7x),
    while moving enough bytes per grid step to amortize the ~0.35 us step cost.
    """
    if HW % 128 == 0:
        max_lanes = max(128, (cap_bytes // (4 * c)) // 128 * 128)
        base = HW // 128
        best = 1
        for d in range(1, base + 1):
            if base % d == 0 and d * 128 <= max_lanes:
                best = d
        T_HW = best * 128
    else:
        # lane dim not 128-divisible: full-image block is always legal
        T_HW = HW

    TB = 1
    if T_HW == HW:
        # small images: fold several samples into one step to amortize overhead
        max_tb = max(1, cap_bytes // (4 * c * HW))
        for d in range(1, BS + 1):
            if BS % d == 0 and d <= max_tb:
                TB = d
    return TB, T_HW


# ---------------------------------------------------------------------------
# Public wrapper
# ---------------------------------------------------------------------------
@functools.partial(
    jax.jit,
    static_argnames=(
        "use_top_k",
        "top_k_ratio",
        "use_weights",
        "poly_one",
        "poly_one_coefficient",
    ),
)
def segmentation_loss(
    prediction,
    target,
    weights=None,
    *,
    use_top_k=False,
    top_k_ratio=1.0,
    use_weights=False,
    poly_one=False,
    poly_one_coefficient=0.0,
):
    b, s, c, h, w = prediction.shape
    BS, HW = b * s, h * w

    # Keep ORIGINAL dtypes: bf16 prediction / narrow-int target halve (or quarter)
    # HBM traffic; the kernel casts to f32 / int32 on load.
    pred = prediction.reshape(BS, c, HW)
    tgt = target.reshape(BS, 1, HW)
    if weights is None:
        weights = jnp.ones((c,), jnp.float32)
    w_col = jnp.asarray(weights, jnp.float32).reshape(c, 1)

    TB, T_HW = _choose_tiles(BS, c, HW)
    grid = (BS // TB, HW // T_HW)

    in_specs = [
        pl.BlockSpec((TB, c, T_HW), lambda i, t: (i, 0, t)),
        pl.BlockSpec((TB, 1, T_HW), lambda i, t: (i, 0, t)),
        pl.BlockSpec((c, 1), lambda i, t: (0, 0)),
    ]

    coef = float(poly_one_coefficient)

    if use_top_k:
        # top-k needs the full per-pixel loss map; write it out and finish in JAX.
        kernel = _make_map_kernel(use_weights, poly_one, coef)
        loss_map = pl.pallas_call(
            kernel,
            out_shape=jax.ShapeDtypeStruct((BS, 1, HW), jnp.float32),
            grid_spec=pltpu.PrefetchScalarGridSpec(
                num_scalar_prefetch=0,
                grid=grid,
                in_specs=in_specs,
                out_specs=pl.BlockSpec((TB, 1, T_HW), lambda i, t: (i, 0, t)),
            ),
            compiler_params=pltpu.CompilerParams(
                dimension_semantics=("parallel", "parallel")),
        )(pred, tgt, w_col)
        loss = loss_map.reshape(b, s, HW)
        k = int(top_k_ratio * HW)
        # TODO(synk): jax.lax.top_k over the full HW axis stays in JAX glue; it can
        # dominate runtime for very large images.
        loss, _ = jax.lax.top_k(loss, k)
        return jnp.mean(loss)

    # No top-k: reduce inside the kernel (per-sample running sums), avoiding the
    # full loss-map HBM writeback + re-read by jnp.mean.
    kernel = _make_sum_kernel(use_weights, poly_one, coef)
    sums = pl.pallas_call(
        kernel,
        out_shape=jax.ShapeDtypeStruct((BS, 1, 128), jnp.float32),
        grid_spec=pltpu.PrefetchScalarGridSpec(
            num_scalar_prefetch=0,
            grid=grid,
            in_specs=in_specs,
            out_specs=pl.BlockSpec((TB, 1, 128), lambda i, t: (i, 0, 0)),
        ),
        compiler_params=pltpu.CompilerParams(
            dimension_semantics=("parallel", "arbitrary")),
    )(pred, tgt, w_col)
    total = jnp.sum(sums[:, 0, 0])
    return total / (BS * HW)


# ---------------------------------------------------------------------------
# Pure-JAX reference (mirrors torch.nn.functional.cross_entropy semantics)
# ---------------------------------------------------------------------------
def _reference_loss(
    prediction,
    target,
    weights=None,
    *,
    use_top_k=False,
    top_k_ratio=1.0,
    use_weights=False,
    poly_one=False,
    poly_one_coefficient=0.0,
):
    b, s, c, h, w = prediction.shape
    logits = prediction.reshape(b * s, c, h * w).astype(jnp.float32)
    tgt = target.reshape(b * s, h * w).astype(jnp.int32)
    logp = jax.nn.log_softmax(logits, axis=1)
    nll = -jnp.take_along_axis(logp, tgt[:, None, :], axis=1)[:, 0, :]
    if use_weights:
        nll = nll * jnp.asarray(weights, jnp.float32)[tgt]
    if poly_one:
        nll = nll + poly_one_coefficient * (1.0 - jnp.exp(-nll))
    loss = nll.reshape(b, s, -1)
    if use_top_k:
        k = int(top_k_ratio * loss.shape[2])
        loss, _ = jax.lax.top_k(loss, k)
    return jnp.mean(loss)


if __name__ == "__main__":
    key = jax.random.PRNGKey(0)
    kp, kt, kp2, kt2 = jax.random.split(key, 4)

    b, s, c, h, w = 2, 3, 4, 16, 16
    prediction = jax.random.normal(kp, (b, s, c, h, w), dtype=jnp.float32)
    target = jax.random.randint(kt, (b, s, h, w), 0, c, dtype=jnp.int32)

    # 1) default config: no weights, no top-k, no poly-one (in-kernel reduction)
    out = jax.block_until_ready(segmentation_loss(prediction, target))
    ref = _reference_loss(prediction, target)
    assert jnp.allclose(out, ref, atol=1e-5, rtol=1e-5), (out, ref)

    # 2) poly-one branch
    out_p1 = jax.block_until_ready(
        segmentation_loss(prediction, target, poly_one=True, poly_one_coefficient=0.5))
    ref_p1 = _reference_loss(prediction, target, poly_one=True, poly_one_coefficient=0.5)
    assert jnp.allclose(out_p1, ref_p1, atol=1e-5, rtol=1e-5), (out_p1, ref_p1)

    # 3) class weights branch
    wts = jnp.array([0.5, 1.0, 2.0, 1.5], jnp.float32)
    out_w = jax.block_until_ready(
        segmentation_loss(prediction, target, wts, use_weights=True))
    ref_w = _reference_loss(prediction, target, wts, use_weights=True)
    assert jnp.allclose(out_w, ref_w, atol=1e-5, rtol=1e-5), (out_w, ref_w)

    # 4) top-k branch (full loss-map kernel + JAX top_k glue)
    out_tk = jax.block_until_ready(
        segmentation_loss(prediction, target, use_top_k=True, top_k_ratio=0.5))
    ref_tk = _reference_loss(prediction, target, use_top_k=True, top_k_ratio=0.5)
    assert jnp.allclose(out_tk, ref_tk, atol=1e-5, rtol=1e-5), (out_tk, ref_tk)

    # 5) bf16 prediction path (no host upcast; cast to f32 happens in-kernel)
    pred_bf16 = prediction.astype(jnp.bfloat16)
    out_bf = jax.block_until_ready(segmentation_loss(pred_bf16, target))
    ref_bf = _reference_loss(pred_bf16.astype(jnp.float32), target)
    assert jnp.allclose(out_bf, ref_bf, atol=1e-2, rtol=1e-2), (out_bf, ref_bf)

    # 6) larger image: exercises lane-axis tiling (T_HW < HW) and the cross-tile
    #    accumulator path, with a non-multiple-of-8 class count.
    b2, s2, c2, h2, w2 = 1, 2, 19, 128, 128
    prediction2 = jax.random.normal(kp2, (b2, s2, c2, h2, w2), dtype=jnp.bfloat16)
    target2 = jax.random.randint(kt2, (b2, s2, h2, w2), 0, c2, dtype=jnp.int32)
    out2 = jax.block_until_ready(segmentation_loss(prediction2, target2))
    ref2 = _reference_loss(prediction2.astype(jnp.float32), target2)
    assert jnp.allclose(out2, ref2, atol=1e-2, rtol=1e-2), (out2, ref2)

    print("KERNEL_OK")
</pallas_src>

<mosaic_0001>
module attributes {stable_mosaic.version = 11 : i64} {
  func.func @kernel(%arg0: i32, %arg1: i32, %arg2: memref<6x4x256xf32, #tpu.memory_space<vmem>>, %arg3: memref<6x1x256xi32, #tpu.memory_space<vmem>>, %arg4: memref<4x1xf32, #tpu.memory_space<vmem>>, %arg5: memref<6x1x128xf32, #tpu.memory_space<vmem>>) attributes {dimension_semantics = [#tpu.dimension_semantics<parallel>, #tpu.dimension_semantics<arbitrary>], iteration_bounds = array<i64: 1, 1>, scalar_prefetch = 0 : i64, scratch_operands = 0 : i64, tpu.core_type = #tpu.core_type<tc>, window_params = [{transform_indices = @transform_0, window_bounds = array<i64: 6, 4, 256>}, {transform_indices = @transform_1, window_bounds = array<i64: 6, 1, 256>}, {pipeline_mode = #tpu.pipeline_mode<synchronous>, transform_indices = @transform_2, window_bounds = array<i64: 4, 1>}, {transform_indices = @transform_3, window_bounds = array<i64: 6, 1, 128>}]} {
    %c0_i32 = arith.constant 0 : i32
    %0 = arith.cmpi eq, %arg1, %c0_i32 : i32
    %1 = arith.extui %0 : i1 to i32
    %c0_i32_0 = arith.constant 0 : i32
    %2 = arith.cmpi ne, %1, %c0_i32_0 : i32
    scf.if %2 {
      %cst_16 = arith.constant 0.000000e+00 : f32
      %28 = vector.broadcast %cst_16 : f32 to vector<6x1x128xf32>
      %c0_17 = arith.constant 0 : index
      %c0_18 = arith.constant 0 : index
      %c0_19 = arith.constant 0 : index
      %29 = vector.load %arg5[%c0_17, %c0_18, %c0_19] : memref<6x1x128xf32, #tpu.memory_space<vmem>>, vector<6x1x128xf32>
      tpu.vector_store %arg5[%c0_17, %c0_18, %c0_19], %28 {strides = array<i32>} : memref<6x1x128xf32, #tpu.memory_space<vmem>>, vector<6x1x128xf32>,
    } else {
    }
    %c0 = arith.constant 0 : index
    %c0_1 = arith.constant 0 : index
    %c0_2 = arith.constant 0 : index
    %3 = vector.load %arg2[%c0, %c0_1, %c0_2] : memref<6x4x256xf32, #tpu.memory_space<vmem>>, vector<6x4x256xf32>
    %c0_3 = arith.constant 0 : index
    %c0_4 = arith.constant 0 : index
    %c0_5 = arith.constant 0 : index
    %4 = vector.load %arg3[%c0_3, %c0_4, %c0_5] : memref<6x1x256xi32, #tpu.memory_space<vmem>>, vector<6x1x256xi32>
    %cst = arith.constant dense<0xFF800000> : vector<6x256xf32>
    %5 = vector.multi_reduction <maximumf>, %3, %cst [1] : vector<6x4x256xf32> to vector<6x256xf32>
    %6 = vector.shape_cast %5 : vector<6x256xf32> to vector<6x1x256xf32>
    %7 = vector.broadcast %6 : vector<6x1x256xf32> to vector<6x4x256xf32>
    %8 = arith.subf %3, %7 : vector<6x4x256xf32>
    %9 = math.exp %8 : vector<6x4x256xf32>
    %cst_6 = arith.constant dense<0.000000e+00> : vector<6x256xf32>
    %10 = vector.multi_reduction <add>, %9, %cst_6 [1] : vector<6x4x256xf32> to vector<6x256xf32>
    %11 = vector.shape_cast %10 : vector<6x256xf32> to vector<6x1x256xf32>
    %12 = math.log %11 : vector<6x1x256xf32>
    %13 = arith.addf %6, %12 : vector<6x1x256xf32>
    %14 = tpu.iota {dimensions = array<i32: 1>} : vector<6x4x256xi32>
    %15 = vector.broadcast %4 : vector<6x1x256xi32> to vector<6x4x256xi32>
    %16 = arith.cmpi eq, %14, %15 : vector<6x4x256xi32>
    %cst_7 = arith.constant 0.000000e+00 : f32
    %17 = vector.broadcast %cst_7 : f32 to vector<6x4x256xf32>
    %18 = arith.select %16, %3, %17 : vector<6x4x256xi1>, vector<6x4x256xf32>
    %cst_8 = arith.constant dense<0.000000e+00> : vector<6x256xf32>
    %19 = vector.multi_reduction <add>, %18, %cst_8 [1] : vector<6x4x256xf32> to vector<6x256xf32>
    %20 = vector.shape_cast %19 : vector<6x256xf32> to vector<6x1x256xf32>
    %21 = arith.subf %13, %20 : vector<6x1x256xf32>
    %cst_9 = arith.constant dense<0.000000e+00> : vector<6x1xf32>
    %22 = vector.multi_reduction <add>, %21, %cst_9 [2] : vector<6x1x256xf32> to vector<6x1xf32>
    %23 = vector.shape_cast %22 : vector<6x1xf32> to vector<6x1x1xf32>
    %c0_10 = arith.constant 0 : index
    %c0_11 = arith.constant 0 : index
    %c0_12 = arith.constant 0 : index
    %24 = vector.load %arg5[%c0_10, %c0_11, %c0_12] : memref<6x1x128xf32, #tpu.memory_space<vmem>>, vector<6x1x128xf32>
    %25 = vector.broadcast %23 : vector<6x1x1xf32> to vector<6x1x128xf32>
    %26 = arith.addf %24, %25 : vector<6x1x128xf32>
    %c0_13 = arith.constant 0 : index
    %c0_14 = arith.constant 0 : index
    %c0_15 = arith.constant 0 : index
    %27 = vector.load %arg5[%c0_13, %c0_14, %c0_15] : memref<6x1x128xf32, #tpu.memory_space<vmem>>, vector<6x1x128xf32>
    tpu.vector_store %arg5[%c0_13, %c0_14, %c0_15], %26 {strides = array<i32>} : memref<6x1x128xf32, #tpu.memory_space<vmem>>, vector<6x1x128xf32>,
    return
  }
  func.func @transform_0(%arg0: i32, %arg1: i32) -> (i32, i32, i32) {
    %c0_i32 = arith.constant 0 : i32
    %c0_i32_0 = arith.constant 0 : i32
    return %arg0, %c0_i32, %arg1 : i32, i32, i32
  }
  func.func @transform_1(%arg0: i32, %arg1: i32) -> (i32, i32, i32) {
    %c0_i32 = arith.constant 0 : i32
    %c0_i32_0 = arith.constant 0 : i32
    return %arg0, %c0_i32, %arg1 : i32, i32, i32
  }
  func.func @transform_2(%arg0: i32, %arg1: i32) -> (i32, i32) {
    %c0_i32 = arith.constant 0 : i32
    %c0_i32_0 = arith.constant 0 : i32
    %c0_i32_1 = arith.constant 0 : i32
    return %c0_i32, %c0_i32_0 : i32, i32
  }
  func.func @transform_3(%arg0: i32, %arg1: i32) -> (i32, i32, i32) {
    %c0_i32 = arith.constant 0 : i32
    %c0_i32_0 = arith.constant 0 : i32
    %c0_i32_1 = arith.constant 0 : i32
    return %arg0, %c0_i32, %c0_i32_0 : i32, i32, i32
  }
}

</mosaic_0001>

<llo_original>
// kernel: segmentation_loss.1
$region0: #{segmentation_loss.1}
  #allocation0 [shape = 'u32[]', space=smem, size = 0x4, offset = 0x4, fixed_abs, tag = 'smem constant byte address 0x4 - core index']
  #allocation1 [shape = 'u32[72,128]{1,0:T(1,128)}', space=vmem, size = 0x9000, scoped, tag = 'internal scratch']
  %s0 = inlined_call_operand.vmem [shape: f32[6,4,256], index: 0, kind: input, shape index: {}]
  %s1 = inlined_call_operand.vmem [shape: s32[6,1,256], index: 1, kind: input, shape index: {}]
  %s2 = inlined_call_operand.vmem [shape: f32[4,1], index: 2, kind: input, shape index: {}]
  %s3 = inlined_call_operand.vmem [shape: f32[6,1,128], index: 3, kind: output, shape index: {}]
  %s4 = sld [smem:[#allocation0]]
  $region26: #{segmentation_loss.1} parent=0
    _
  %s6 = ssub.s32 1, %s4
  %s7 = scalar_select 0, %s6, %s4
  // Predicated region
  $region2: #{segmentation_loss.1} parent=0 // pred_check
    _
  $region3: #{segmentation_loss.1} parent=0 // pred_check_branch
    %9 = sbr.rel (0) target = $region5
  $region4: #{segmentation_loss.1} parent=0 // pred_region
    _
  $region5: #{segmentation_loss.1} parent=0 // pred_fallthru
    _
  // Predicated region
  $region6: #{segmentation_loss.1} parent=0 // pred_check
    _
  $region7: #{segmentation_loss.1} parent=0 // pred_check_branch
    %11 = sbr.rel (0) target = $region9
  $region8: #{segmentation_loss.1} parent=0 // pred_region
    _
  $region9: #{segmentation_loss.1} parent=0 // pred_fallthru
    _
  // Predicated region
  $region10: #{segmentation_loss.1} parent=0 // pred_check
    _
  $region11: #{segmentation_loss.1} parent=0 // pred_check_branch
    %13 = sbr.rel (0) target = $region13
  $region12: #{segmentation_loss.1} parent=0 // pred_region
    _
  $region13: #{segmentation_loss.1} parent=0 // pred_fallthru
    _
  %p14 = scmp.eq.s32.totalorder 0, 0
  // Predicated region
  $region14: #{segmentation_loss.1} parent=0 // pred_check
    %p15 = pneg %p14
  $region15: #{segmentation_loss.1} parent=0 // pred_check_branch
    %17 = sbr.rel (%p15) target = $region17
  $region16: #{segmentation_loss.1} parent=0 // pred_region
    %18 = vst [vmem:[%s3] sm:$0x1] 0.0
    %19 = vst [vmem:[%s3 + $0x1] sm:$0x1] 0.0
    %20 = vst [vmem:[%s3 + $0x2] sm:$0x1] 0.0
    %21 = vst [vmem:[%s3 + $0x3] sm:$0x1] 0.0
    %22 = vst [vmem:[%s3 + $0x4] sm:$0x1] 0.0
    %23 = vst [vmem:[%s3 + $0x5] sm:$0x1] 0.0
  $region17: #{segmentation_loss.1} parent=0 // pred_fallthru
    _
  %v24 = vld [vmem:[%s0] sm:$0xff]
  %v25 = vld [vmem:[%s0 + $0x8] sm:$0xff]
  %v26 = vld [vmem:[%s0 + $0x10] sm:$0xff]
  %v27 = vld [vmem:[%s0 + $0x18] sm:$0xff]
  %v28 = vld [vmem:[%s0 + $0x20] sm:$0xff]
  %v29 = vld [vmem:[%s0 + $0x28] sm:$0xff]
  %v30 = vld [vmem:[%s1] sm:$0x3]
  %v31 = vld [vmem:[%s1 + $0x2] sm:$0x3]
  %v32 = vld [vmem:[%s1 + $0x4] sm:$0x3]
  %v33 = vld [vmem:[%s1 + $0x6] sm:$0x3]
  %v34 = vld [vmem:[%s1 + $0x8] sm:$0x3]
  %v35 = vld [vmem:[%s1 + $0xa] sm:$0x3]
  %42 = vst [vmem:[#allocation1] ss:$2 sm:$0xff] %v24
  %v43 = vld.sshfl [vmem:[#allocation1] sm:$0xff pattern:$0x75316420]
  %v44 = vld.sshfl [vmem:[#allocation1 + $0x8] sm:$0xff pattern:$0x75316420]
  %s45 = scalar_lea.vmem [#allocation1], 16
  %46 = vst [vmem:[%s45] ss:$2 sm:$0xff] %v25
  %v47 = vld.sshfl [vmem:[#allocation1 + $0x10] sm:$0xff pattern:$0x75316420]
  %v48 = vld.sshfl [vmem:[#allocation1 + $0x18] sm:$0xff pattern:$0x75316420]
  %s49 = scalar_lea.vmem [#allocation1], 32
  %50 = vst [vmem:[%s49] ss:$2 sm:$0xff] %v26
  %v51 = vld.sshfl [vmem:[#allocation1 + $0x20] sm:$0xff pattern:$0x75316420]
  %v52 = vld.sshfl [vmem:[#allocation1 + $0x28] sm:$0xff pattern:$0x75316420]
  %s53 = scalar_lea.vmem [#allocation1], 48
  %54 = vst [vmem:[%s53] ss:$2 sm:$0xff] %v27
  %v55 = vld.sshfl [vmem:[#allocation1 + $0x30] sm:$0xff pattern:$0x75316420]
  %v56 = vld.sshfl [vmem:[#allocation1 + $0x38] sm:$0xff pattern:$0x75316420]
  %57 = vst [vmem:[#allocation1] ss:$2 sm:$0xff] %v28
  %v58 = vld.sshfl [vmem:[#allocation1] sm:$0xff pattern:$0x75316420]
  %v59 = vld.sshfl [vmem:[#allocation1 + $0x8] sm:$0xff pattern:$0x75316420]
  %60 = vst [vmem:[%s45] ss:$2 sm:$0xff] %v29
  %v61 = vld.sshfl [vmem:[#allocation1 + $0x10] sm:$0xff pattern:$0x75316420]
  %v62 = vld.sshfl [vmem:[#allocation1 + $0x18] sm:$0xff pattern:$0x75316420]
  %vm75 = vcmask 1043456
  %v76 = vsel %vm75, %v43, -inf
  %v77 = vrot.slane %v76, 4
  %v78 = vmax.f32 %v76, %v77
  %v79 = vrot.slane %v78, 2
  %v80 = vmax.f32 %v78, %v79
  %v81 = vrot.slane %v80, 1
  %v82 = vmax.f32 %v80, %v81
  %v83 = vsel %vm75, %v44, -inf
  %v84 = vrot.slane %v83, 4
  %v85 = vmax.f32 %v83, %v84
  %v86 = vrot.slane %v85, 2
  %v87 = vmax.f32 %v85, %v86
  %v88 = vrot.slane %v87, 1
  %v89 = vmax.f32 %v87, %v88
  %v90 = vsel %vm75, %v47, -inf
  %v91 = vrot.slane %v90, 4
  %v92 = vmax.f32 %v90, %v91
  %v93 = vrot.slane %v92, 2
  %v94 = vmax.f32 %v92, %v93
  %v95 = vrot.slane %v94, 1
  %v96 = vmax.f32 %v94, %v95
  %v97 = vsel %vm75, %v48, -inf
  %v98 = vrot.slane %v97, 4
  %v99 = vmax.f32 %v97, %v98
  %v100 = vrot.slane %v99, 2
  %v101 = vmax.f32 %v99, %v100
  %v102 = vrot.slane %v101, 1
  %v103 = vmax.f32 %v101, %v102
  %v104 = vsel %vm75, %v51, -inf
  %v105 = vrot.slane %v104, 4
  %v106 = vmax.f32 %v104, %v105
  %v107 = vrot.slane %v106, 2
  %v108 = vmax.f32 %v106, %v107
  %v109 = vrot.slane %v108, 1
  %v110 = vmax.f32 %v108, %v109
  %v111 = vsel %vm75, %v52, -inf
  %v112 = vrot.slane %v111, 4
  %v113 = vmax.f32 %v111, %v112
  %v114 = vrot.slane %v113, 2
  %v115 = vmax.f32 %v113, %v114
  %v116 = vrot.slane %v115, 1
  %v117 = vmax.f32 %v115, %v116
  %v118 = vsel %vm75, %v55, -inf
  %v119 = vrot.slane %v118, 4
  %v120 = vmax.f32 %v118, %v119
  %v121 = vrot.slane %v120, 2
  %v122 = vmax.f32 %v120, %v121
  %v123 = vrot.slane %v122, 1
  %v124 = vmax.f32 %v122, %v123
  %v125 = vsel %vm75, %v56, -inf
  %v126 = vrot.slane %v125, 4
  %v127 = vmax.f32 %v125, %v126
  %v128 = vrot.slane %v127, 2
  %v129 = vmax.f32 %v127, %v128
  %v130 = vrot.slane %v129, 1
  %v131 = vmax.f32 %v129, %v130
  %v132 = vsel %vm75, %v58, -inf
  %v133 = vrot.slane %v132, 4
  %v134 = vmax.f32 %v132, %v133
  %v135 = vrot.slane %v134, 2
  %v136 = vmax.f32 %v134, %v135
  %v137 = vrot.slane %v136, 1
  %v138 = vmax.f32 %v136, %v137
  %v139 = vsel %vm75, %v59, -inf
  %v140 = vrot.slane %v139, 4
  %v141 = vmax.f32 %v139, %v140
  %v142 = vrot.slane %v141, 2
  %v143 = vmax.f32 %v141, %v142
  %v144 = vrot.slane %v143, 1
  %v145 = vmax.f32 %v143, %v144
  %v146 = vsel %vm75, %v61, -inf
  %v147 = vrot.slane %v146, 4
  %v148 = vmax.f32 %v146, %v147
  %v149 = vrot.slane %v148, 2
  %v150 = vmax.f32 %v148, %v149
  %v151 = vrot.slane %v150, 1
  %v152 = vmax.f32 %v150, %v151
  %v153 = vsel %vm75, %v62, -inf
  %v154 = vrot.slane %v153, 4
  %v155 = vmax.f32 %v153, %v154
  %v156 = vrot.slane %v155, 2
  %v157 = vmax.f32 %v155, %v156
  %v158 = vrot.slane %v157, 1
  %v159 = vmax.f32 %v157, %v158
  %v172 = vrot.slane %v89, 4
  %v173 = vrot.slane %v103, 4
  %v174 = vrot.slane %v117, 4
  %v175 = vrot.slane %v131, 4
  %v176 = vrot.slane %v145, 4
  %v177 = vrot.slane %v159, 4
  %v178 = vsel %vm75, %v82, %v172
  %v179 = vsel %vm75, %v96, %v173
  %v180 = vsel %vm75, %v110, %v174
  %v181 = vsel %vm75, %v124, %v175
  %v182 = vsel %vm75, %v138, %v176
  %v183 = vsel %vm75, %v152, %v177
  %v190 = vsub.f32 %v24, %v178
  %v191 = vsub.f32 %v25, %v179
  %v192 = vsub.f32 %v26, %v180
  %v193 = vsub.f32 %v27, %v181
  %v194 = vsub.f32 %v28, %v182
  %v195 = vsub.f32 %v29, %v183
  %v196 = vmul.f32 %v190, 1.442695
  %v197 = vpow.pop %v196
  %v198 = vmul.f32 %v191, 1.442695
  %v199 = vpow.pop %v198
  %v200 = vmul.f32 %v192, 1.442695
  %v201 = vpow.pop %v200
  %v202 = vmul.f32 %v193, 1.442695
  %v203 = vpow.pop %v202
  %v204 = vmul.f32 %v194, 1.442695
  %v205 = vpow.pop %v204
  %v206 = vmul.f32 %v195, 1.442695
  %v207 = vpow.pop %v206
  %214 = vst [vmem:[#allocation1] ss:$2 sm:$0xff] %v197
  %v215 = vld.sshfl [vmem:[#allocation1] sm:$0xff pattern:$0x75316420]
  %v216 = vld.sshfl [vmem:[#allocation1 + $0x8] sm:$0xff pattern:$0x75316420]
  %s217 = scalar_lea.vmem [#allocation1], 16
  %218 = vst [vmem:[%s217] ss:$2 sm:$0xff] %v199
  %v219 = vld.sshfl [vmem:[#allocation1 + $0x10] sm:$0xff pattern:$0x75316420]
  %v220 = vld.sshfl [vmem:[#allocation1 + $0x18] sm:$0xff pattern:$0x75316420]
  %s221 = scalar_lea.vmem [#allocation1], 32
  %222 = vst [vmem:[%s221] ss:$2 sm:$0xff] %v201
  %v223 = vld.sshfl [vmem:[#allocation1 + $0x20] sm:$0xff pattern:$0x75316420]
  %v224 = vld.sshfl [vmem:[#allocation1 + $0x28] sm:$0xff pattern:$0x75316420]
  %s225 = scalar_lea.vmem [#allocation1], 48
  %226 = vst [vmem:[%s225] ss:$2 sm:$0xff] %v203
  %v227 = vld.sshfl [vmem:[#allocation1 + $0x30] sm:$0xff pattern:$0x75316420]
  %v228 = vld.sshfl [vmem:[#allocation1 + $0x38] sm:$0xff pattern:$0x75316420]
  %229 = vst [vmem:[#allocation1] ss:$2 sm:$0xff] %v205
  %v230 = vld.sshfl [vmem:[#allocation1] sm:$0xff pattern:$0x75316420]
  %v231 = vld.sshfl [vmem:[#allocation1 + $0x8] sm:$0xff pattern:$0x75316420]
  %232 = vst [vmem:[%s217] ss:$2 sm:$0xff] %v207
  %v233 = vld.sshfl [vmem:[#allocation1 + $0x10] sm:$0xff pattern:$0x75316420]
  %v234 = vld.sshfl [vmem:[#allocation1 + $0x18] sm:$0xff pattern:$0x75316420]
  %v247 = vsel %vm75, %v215, 0.0
  %v248 = vrot.slane %v247, 4
  %v249 = vadd.f32 %v247, %v248
  %v250 = vrot.slane %v249, 2
  %v251 = vadd.f32 %v249, %v250
  %v252 = vrot.slane %v251, 1
  %v253 = vadd.f32 %v251, %v252
  %v254 = vsel %vm75, %v216, 0.0
  %v255 = vrot.slane %v254, 4
  %v256 = vadd.f32 %v254, %v255
  %v257 = vrot.slane %v256, 2
  %v258 = vadd.f32 %v256, %v257
  %v259 = vrot.slane %v258, 1
  %v260 = vadd.f32 %v258, %v259
  %v261 = vsel %vm75, %v219, 0.0
  %v262 = vrot.slane %v261, 4
  %v263 = vadd.f32 %v261, %v262
  %v264 = vrot.slane %v263, 2
  %v265 = vadd.f32 %v263, %v264
  %v266 = vrot.slane %v265, 1
  %v267 = vadd.f32 %v265, %v266
  %v268 = vsel %vm75, %v220, 0.0
  %v269 = vrot.slane %v268, 4
  %v270 = vadd.f32 %v268, %v269
  %v271 = vrot.slane %v270, 2
  %v272 = vadd.f32 %v270, %v271
  %v273 = vrot.slane %v272, 1
  %v274 = vadd.f32 %v272, %v273
  %v275 = vsel %vm75, %v223, 0.0
  %v276 = vrot.slane %v275, 4
  %v277 = vadd.f32 %v275, %v276
  %v278 = vrot.slane %v277, 2
  %v279 = vadd.f32 %v277, %v278
  %v280 = vrot.slane %v279, 1
  %v281 = vadd.f32 %v279, %v280
  %v282 = vsel %vm75, %v224, 0.0
  %v283 = vrot.slane %v282, 4
  %v284 = vadd.f32 %v282, %v283
  %v285 = vrot.slane %v284, 2
  %v286 = vadd.f32 %v284, %v285
  %v287 = vrot.slane %v286, 1
  %v288 = vadd.f32 %v286, %v287
  %v289 = vsel %vm75, %v227, 0.0
  %v290 = vrot.slane %v289, 4
  %v291 = vadd.f32 %v289, %v290
  %v292 = vrot.slane %v291, 2
  %v293 = vadd.f32 %v291, %v292
  %v294 = vrot.slane %v293, 1
  %v295 = vadd.f32 %v293, %v294
  %v296 = vsel %vm75, %v228, 0.0
  %v297 = vrot.slane %v296, 4
  %v298 = vadd.f32 %v296, %v297
  %v299 = vrot.slane %v298, 2
  %v300 = vadd.f32 %v298, %v299
  %v301 = vrot.slane %v300, 1
  %v302 = vadd.f32 %v300, %v301
  %v303 = vsel %vm75, %v230, 0.0
  %v304 = vrot.slane %v303, 4
  %v305 = vadd.f32 %v303, %v304
  %v306 = vrot.slane %v305, 2
  %v307 = vadd.f32 %v305, %v306
  %v308 = vrot.slane %v307, 1
  %v309 = vadd.f32 %v307, %v308
  %v310 = vsel %vm75, %v231, 0.0
  %v311 = vrot.slane %v310, 4
  %v312 = vadd.f32 %v310, %v311
  %v313 = vrot.slane %v312, 2
  %v314 = vadd.f32 %v312, %v313
  %v315 = vrot.slane %v314, 1
  %v316 = vadd.f32 %v314, %v315
  %v317 = vsel %vm75, %v233, 0.0
  %v318 = vrot.slane %v317, 4
  %v319 = vadd.f32 %v317, %v318
  %v320 = vrot.slane %v319, 2
  %v321 = vadd.f32 %v319, %v320
  %v322 = vrot.slane %v321, 1
  %v323 = vadd.f32 %v321, %v322
  %v324 = vsel %vm75, %v234, 0.0
  %v325 = vrot.slane %v324, 4
  %v326 = vadd.f32 %v324, %v325
  %v327 = vrot.slane %v326, 2
  %v328 = vadd.f32 %v326, %v327
  %v329 = vrot.slane %v328, 1
  %v330 = vadd.f32 %v328, %v329
  %v331 = vlog2.pop %v253
  %v332 = vmul.f32 %v331, 0.6931472
  %v333 = vlog2.pop %v260
  %v334 = vmul.f32 %v333, 0.6931472
  %v335 = vlog2.pop %v267
  %v336 = vmul.f32 %v335, 0.6931472
  %v337 = vlog2.pop %v274
  %v338 = vmul.f32 %v337, 0.6931472
  %v339 = vlog2.pop %v281
  %v340 = vmul.f32 %v339, 0.6931472
  %v341 = vlog2.pop %v288
  %v342 = vmul.f32 %v341, 0.6931472
  %v343 = vlog2.pop %v295
  %v344 = vmul.f32 %v343, 0.6931472
  %v345 = vlog2.pop %v302
  %v346 = vmul.f32 %v345, 0.6931472
  %v347 = vlog2.pop %v309
  %v348 = vmul.f32 %v347, 0.6931472
  %v349 = vlog2.pop %v316
  %v350 = vmul.f32 %v349, 0.6931472
  %v351 = vlog2.pop %v323
  %v352 = vmul.f32 %v351, 0.6931472
  %v353 = vlog2.pop %v330
  %v354 = vmul.f32 %v353, 0.6931472
  %v355 = vadd.f32 %v82, %v332
  %v356 = vadd.f32 %v89, %v334
  %v357 = vadd.f32 %v96, %v336
  %v358 = vadd.f32 %v103, %v338
  %v359 = vadd.f32 %v110, %v340
  %v360 = vadd.f32 %v117, %v342
  %v361 = vadd.f32 %v124, %v344
  %v362 = vadd.f32 %v131, %v346
  %v363 = vadd.f32 %v138, %v348
  %v364 = vadd.f32 %v145, %v350
  %v365 = vadd.f32 %v152, %v352
  %v366 = vadd.f32 %v159, %v354
  %v367 = vlaneseq
  %v368 = vshrl.u32 %v367, 7
  %v369 = vperm.slane %v30, 0
  %v370 = vperm.slane %v30, 1
  %v371 = vperm.slane %v31, 0
  %v372 = vperm.slane %v31, 1
  %v373 = vperm.slane %v32, 0
  %v374 = vperm.slane %v32, 1
  %v375 = vperm.slane %v33, 0
  %v376 = vperm.slane %v33, 1
  %v377 = vperm.slane %v34, 0
  %v378 = vperm.slane %v34, 1
  %v379 = vperm.slane %v35, 0
  %v380 = vperm.slane %v35, 1
  %vm381 = vcmp.eq.s32.totalorder %v368, %v369
  %vm382 = vcmp.eq.s32.totalorder %v368, %v370
  %vm383 = vcmp.eq.s32.totalorder %v368, %v371
  %vm384 = vcmp.eq.s32.totalorder %v368, %v372
  %vm385 = vcmp.eq.s32.totalorder %v368, %v373
  %vm386 = vcmp.eq.s32.totalorder %v368, %v374
  %vm387 = vcmp.eq.s32.totalorder %v368, %v375
  %vm388 = vcmp.eq.s32.totalorder %v368, %v376
  %vm389 = vcmp.eq.s32.totalorder %v368, %v377
  %vm390 = vcmp.eq.s32.totalorder %v368, %v378
  %vm391 = vcmp.eq.s32.totalorder %v368, %v379
  %vm392 = vcmp.eq.s32.totalorder %v368, %v380
  %393 = vst [vmem:[#allocation1] ss:$2 sm:$0xff] %v24
  %v394 = vld.sshfl [vmem:[#allocation1] sm:$0xff pattern:$0x75316420]
  %v395 = vld.sshfl [vmem:[#allocation1 + $0x8] sm:$0xff pattern:$0x75316420]
  %s396 = scalar_lea.vmem [#allocation1], 16
  %397 = vst [vmem:[%s396] ss:$2 sm:$0xff] %v25
  %v398 = vld.sshfl [vmem:[#allocation1 + $0x10] sm:$0xff pattern:$0x75316420]
  %v399 = vld.sshfl [vmem:[#allocation1 + $0x18] sm:$0xff pattern:$0x75316420]
  %s400 = scalar_lea.vmem [#allocation1], 32
  %401 = vst [vmem:[%s400] ss:$2 sm:$0xff] %v26
  %v402 = vld.sshfl [vmem:[#allocation1 + $0x20] sm:$0xff pattern:$0x75316420]
  %v403 = vld.sshfl [vmem:[#allocation1 + $0x28] sm:$0xff pattern:$0x75316420]
  %s404 = scalar_lea.vmem [#allocation1], 48
  %405 = vst [vmem:[%s404] ss:$2 sm:$0xff] %v27
  %v406 = vld.sshfl [vmem:[#allocation1 + $0x30] sm:$0xff pattern:$0x75316420]
  %v407 = vld.sshfl [vmem:[#allocation1 + $0x38] sm:$0xff pattern:$0x75316420]
  %408 = vst [vmem:[#allocation1] ss:$2 sm:$0xff] %v28
  %v409 = vld.sshfl [vmem:[#allocation1] sm:$0xff pattern:$0x75316420]
  %v410 = vld.sshfl [vmem:[#allocation1 + $0x8] sm:$0xff pattern:$0x75316420]
  %411 = vst [vmem:[%s396] ss:$2 sm:$0xff] %v29
  %v412 = vld.sshfl [vmem:[#allocation1 + $0x10] sm:$0xff pattern:$0x75316420]
  %v413 = vld.sshfl [vmem:[#allocation1 + $0x18] sm:$0xff pattern:$0x75316420]
  %v426 = vsel %vm381, %v394, 0.0
  %v427 = vsel %vm382, %v395, 0.0
  %v428 = vsel %vm383, %v398, 0.0
  %v429 = vsel %vm384, %v399, 0.0
  %v430 = vsel %vm385, %v402, 0.0
  %v431 = vsel %vm386, %v403, 0.0
  %v432 = vsel %vm387, %v406, 0.0
  %v433 = vsel %vm388, %v407, 0.0
  %v434 = vsel %vm389, %v409, 0.0
  %v435 = vsel %vm390, %v410, 0.0
  %v436 = vsel %vm391, %v412, 0.0
  %v437 = vsel %vm392, %v413, 0.0
  %v438 = vsel %vm75, %v426, 0.0
  %v439 = vrot.slane %v438, 4
  %v440 = vadd.f32 %v438, %v439
  %v441 = vrot.slane %v440, 2
  %v442 = vadd.f32 %v440, %v441
  %v443 = vrot.slane %v442, 1
  %v444 = vadd.f32 %v442, %v443
  %v445 = vsel %vm75, %v427, 0.0
  %v446 = vrot.slane %v445, 4
  %v447 = vadd.f32 %v445, %v446
  %v448 = vrot.slane %v447, 2
  %v449 = vadd.f32 %v447, %v448
  %v450 = vrot.slane %v449, 1
  %v451 = vadd.f32 %v449, %v450
  %v452 = vsel %vm75, %v428, 0.0
  %v453 = vrot.slane %v452, 4
  %v454 = vadd.f32 %v452, %v453
  %v455 = vrot.slane %v454, 2
  %v456 = vadd.f32 %v454, %v455
  %v457 = vrot.slane %v456, 1
  %v458 = vadd.f32 %v456, %v457
  %v459 = vsel %vm75, %v429, 0.0
  %v460 = vrot.slane %v459, 4
  %v461 = vadd.f32 %v459, %v460
  %v462 = vrot.slane %v461, 2
  %v463 = vadd.f32 %v461, %v462
  %v464 = vrot.slane %v463, 1
  %v465 = vadd.f32 %v463, %v464
  %v466 = vsel %vm75, %v430, 0.0
  %v467 = vrot.slane %v466, 4
  %v468 = vadd.f32 %v466, %v467
  %v469 = vrot.slane %v468, 2
  %v470 = vadd.f32 %v468, %v469
  %v471 = vrot.slane %v470, 1
  %v472 = vadd.f32 %v470, %v471
  %v473 = vsel %vm75, %v431, 0.0
  %v474 = vrot.slane %v473, 4
  %v475 = vadd.f32 %v473, %v474
  %v476 = vrot.slane %v475, 2
  %v477 = vadd.f32 %v475, %v476
  %v478 = vrot.slane %v477, 1
  %v479 = vadd.f32 %v477, %v478
  %v480 = vsel %vm75, %v432, 0.0
  %v481 = vrot.slane %v480, 4
  %v482 = vadd.f32 %v480, %v481
  %v483 = vrot.slane %v482, 2
  %v484 = vadd.f32 %v482, %v483
  %v485 = vrot.slane %v484, 1
  %v486 = vadd.f32 %v484, %v485
  %v487 = vsel %vm75, %v433, 0.0
  %v488 = vrot.slane %v487, 4
  %v489 = vadd.f32 %v487, %v488
  %v490 = vrot.slane %v489, 2
  %v491 = vadd.f32 %v489, %v490
  %v492 = vrot.slane %v491, 1
  %v493 = vadd.f32 %v491, %v492
  %v494 = vsel %vm75, %v434, 0.0
  %v495 = vrot.slane %v494, 4
  %v496 = vadd.f32 %v494, %v495
  %v497 = vrot.slane %v496, 2
  %v498 = vadd.f32 %v496, %v497
  %v499 = vrot.slane %v498, 1
  %v500 = vadd.f32 %v498, %v499
  %v501 = vsel %vm75, %v435, 0.0
  %v502 = vrot.slane %v501, 4
  %v503 = vadd.f32 %v501, %v502
  %v504 = vrot.slane %v503, 2
  %v505 = vadd.f32 %v503, %v504
  %v506 = vrot.slane %v505, 1
  %v507 = vadd.f32 %v505, %v506
  %v508 = vsel %vm75, %v436, 0.0
  %v509 = vrot.slane %v508, 4
  %v510 = vadd.f32 %v508, %v509
  %v511 = vrot.slane %v510, 2
  %v512 = vadd.f32 %v510, %v511
  %v513 = vrot.slane %v512, 1
  %v514 = vadd.f32 %v512, %v513
  %v515 = vsel %vm75, %v437, 0.0
  %v516 = vrot.slane %v515, 4
  %v517 = vadd.f32 %v515, %v516
  %v518 = vrot.slane %v517, 2
  %v519 = vadd.f32 %v517, %v518
  %v520 = vrot.slane %v519, 1
  %v521 = vadd.f32 %v519, %v520
  %v522 = vsub.f32 %v355, %v444
  %v523 = vsub.f32 %v356, %v451
  %v524 = vsub.f32 %v357, %v458
  %v525 = vsub.f32 %v358, %v465
  %v526 = vsub.f32 %v359, %v472
  %v527 = vsub.f32 %v360, %v479
  %v528 = vsub.f32 %v361, %v486
  %v529 = vsub.f32 %v362, %v493
  %v530 = vsub.f32 %v363, %v500
  %v531 = vsub.f32 %v364, %v507
  %v532 = vsub.f32 %v365, %v514
  %v533 = vsub.f32 %v366, %v521
  %v534 = vadd.f32 %v522, %v523
  %535 = vadd.xlane.f32.xlu0 %v534
  %v536 = vpop.xlane.xlu0 %535
  %v537 = vadd.f32 %v524, %v525
  %538 = vadd.xlane.f32.xlu0 %v537
  %v539 = vpop.xlane.xlu0 %538
  %v540 = vadd.f32 %v526, %v527
  %541 = vadd.xlane.f32.xlu0 %v540
  %v542 = vpop.xlane.xlu0 %541
  %v543 = vadd.f32 %v528, %v529
  %544 = vadd.xlane.f32.xlu0 %v543
  %v545 = vpop.xlane.xlu0 %544
  %v546 = vadd.f32 %v530, %v531
  %547 = vadd.xlane.f32.xlu0 %v546
  %v548 = vpop.xlane.xlu0 %547
  %v549 = vadd.f32 %v532, %v533
  %550 = vadd.xlane.f32.xlu0 %v549
  %v551 = vpop.xlane.xlu0 %550
  %v552 = vld [vmem:[%s3] sm:$0x1]
  %v553 = vld [vmem:[%s3 + $0x1] sm:$0x1]
  %v554 = vld [vmem:[%s3 + $0x2] sm:$0x1]
  %v555 = vld [vmem:[%s3 + $0x3] sm:$0x1]
  %v556 = vld [vmem:[%s3 + $0x4] sm:$0x1]
  %v557 = vld [vmem:[%s3 + $0x5] sm:$0x1]
  %v558 = vadd.f32 %v552, %v536
  %v559 = vadd.f32 %v553, %v539
  %v560 = vadd.f32 %v554, %v542
  %v561 = vadd.f32 %v555, %v545
  %v562 = vadd.f32 %v556, %v548
  %v563 = vadd.f32 %v557, %v551
  %564 = vst [vmem:[%s3] sm:$0x1] %v558
  %565 = vst [vmem:[%s3 + $0x1] sm:$0x1] %v559
  %566 = vst [vmem:[%s3 + $0x2] sm:$0x1] %v560
  %567 = vst [vmem:[%s3 + $0x3] sm:$0x1] %v561
  %568 = vst [vmem:[%s3 + $0x4] sm:$0x1] %v562
  %569 = vst [vmem:[%s3 + $0x5] sm:$0x1] %v563
  // Predicated region
  $region18: #{segmentation_loss.1} parent=0 // pred_check
    _
  $region19: #{segmentation_loss.1} parent=0 // pred_check_branch
    %571 = sbr.rel (0) target = $region21
  $region20: #{segmentation_loss.1} parent=0 // pred_region
    _
  $region21: #{segmentation_loss.1} parent=0 // pred_fallthru
    _
  // Predicated region
  $region22: #{segmentation_loss.1} parent=0 // pred_check
    _
  $region23: #{segmentation_loss.1} parent=0 // pred_check_branch
    %573 = sbr.rel (0) target = $region25
  $region24: #{segmentation_loss.1} parent=0 // pred_region
    _
  $region25: #{segmentation_loss.1} parent=0 // pred_fallthru
    _

</llo_original>
